<compile_context>
chip_gen: v7x
topology: tpu7x:2x2x1
jax: 0.10.0
libtpu: 0.0.40
codegen_flags: <defaults>
</compile_context>

<pallas_src>
import functools

import jax
import jax.numpy as jnp
from jax.experimental import pallas as pl
from jax.experimental.pallas import tpu as pltpu

_LN_EPS = 1e-5


def _round_up(x, m):
    return (x + m - 1) // m * m


def _cdiv(a, b):
    return -(-a // b)


# --------------------------------------------------------------------------- #
# Fused kernel: both heads over a tile of rows (M = B*N*T rows, D features).   #
# --------------------------------------------------------------------------- #
def _heads_kernel(x_ref, wcat_ref, bcat_ref, lngb_ref, wr23_ref, br23_ref,
                  wc_ref, pred_ref, logit_ref, *, h1):
    # Cast to bf16 in-kernel (no wrapper-side cast/pad round trip of x).
    x = x_ref[...].astype(wcat_ref.dtype)                      # (TM, D) bf16

    # One fused first-layer matmul for both heads: [D, H1 + F1] weight.
    y = jnp.dot(x, wcat_ref[...], preferred_element_type=jnp.float32)
    y = y + bcat_ref[...]                                      # (TM, H1+F1) f32
    h = y[:, :h1]                                              # reg branch (H1 % 128 == 0)
    hf = y[:, h1:]                                             # cls branch

    # ---- regression head: LayerNorm -> ReLU -> folded Linear (wr2@wr3) ----
    lngb = lngb_ref[...]                                       # (2, H1) f32: gamma / beta
    mu = jnp.mean(h, axis=-1, keepdims=True)
    hc = h - mu
    var = jnp.mean(hc * hc, axis=-1, keepdims=True)
    hn = hc * jax.lax.rsqrt(var + _LN_EPS)
    hn = hn * lngb[0:1, :] + lngb[1:2, :]
    hn = jnp.maximum(hn, 0.0)                                  # ReLU (f32)
    pred = jnp.dot(hn.astype(wr23_ref.dtype), wr23_ref[...],
                   preferred_element_type=jnp.float32) + br23_ref[...]
    pred_ref[...] = pred.astype(pred_ref.dtype)

    # ---- classification head: ReLU -> folded (wf2@wc1@wc2) scalar logit ----
    # f32 VPU multiply + lane reduction (MXU stays free). The folded bias is a
    # constant across all logits and cancels in log_softmax, so it is dropped.
    hf = jnp.maximum(hf, 0.0)
    logit = jnp.sum(hf * wc_ref[...], axis=-1, keepdims=True)
    logit_ref[...] = logit.astype(logit_ref.dtype)


# --------------------------------------------------------------------------- #
# Wrapper                                                                      #
# --------------------------------------------------------------------------- #
def generator_with_parallel_heads(x, params, *, tm_max=1024,
                                  vmem_budget=24 * 1024 * 1024):
    """x: [B, N, T, d_model] -> (pred [B,N,T,out_size//2,2], conf [B,N,T])."""
    B, N, T, D = x.shape
    wr1, br1 = params["wr1"], params["br1"]
    ln_g, ln_b = params["ln_g"], params["ln_b"]
    wr2, br2 = params["wr2"], params["br2"]
    wr3, br3 = params["wr3"], params["br3"]
    wf1, bf1 = params["wf1"], params["bf1"]
    wf2, bf2 = params["wf2"], params["bf2"]
    wc1, _bc1 = params["wc1"], params["bc1"]
    wc2, _bc2 = params["wc2"], params["bc2"]

    H1 = wr1.shape[1]            # 2 * reg_h_dim
    F1 = wf1.shape[1]            # 2 * d_model
    out_size = wr3.shape[1]
    assert out_size % 2 == 0, "out_size must be even for the (.., -1, 2) view"

    # Fold consecutive Linear layers (pure linear-algebra identities, f32).
    wr23 = wr2 @ wr3                                    # [H1, out_size]
    br23 = br2 @ wr3 + br3                              # [1, out_size]
    wc_row = (wf2 @ wc1 @ wc2).T                        # [1, F1]  (cls bias cancels)

    # Fused / consolidated parameters.
    mxu_dtype = jnp.bfloat16
    w_cat = jnp.concatenate([wr1, wf1], axis=1).astype(mxu_dtype)   # [D, H1+F1]
    b_cat = jnp.concatenate([br1, bf1], axis=1)                     # [1, H1+F1] f32
    ln_gb = jnp.concatenate([ln_g, ln_b], axis=0)                   # [2, H1]    f32
    wr23_c = wr23.astype(mxu_dtype)

    # Balanced row tiling: >= 2 grid steps (v7x megacore), tm multiple of 16,
    # capped by a conservative cross-generation VMEM budget. No padding of x.
    M = B * N * T
    x2d = x.reshape(M, D)
    per_row_bytes = 4 * (2 * D + 4 * (H1 + F1) + 2 * out_size + 2)
    tm_cap = max(16, (vmem_budget // per_row_bytes) // 16 * 16)
    tm_eff_max = max(16, min(tm_max, tm_cap))
    num_tiles = _cdiv(M, tm_eff_max)
    if num_tiles < 2 and M > 16:
        num_tiles = 2
    tm = min(_round_up(_cdiv(M, num_tiles), 16), _round_up(M, 16))
    grid = (_cdiv(M, tm),)

    flops = 2 * M * (D * (H1 + F1) + H1 * out_size + F1) + 10 * M * H1
    bytes_accessed = (M * D * 4
                      + (D * (H1 + F1) + H1 * out_size) * 2
                      + (3 * H1 + 2 * F1 + out_size) * 4
                      + M * (out_size + 1) * 4)

    pred2d, logit2d = pl.pallas_call(
        functools.partial(_heads_kernel, h1=H1),
        out_shape=(jax.ShapeDtypeStruct((M, out_size), jnp.float32),
                   jax.ShapeDtypeStruct((M, 1), jnp.float32)),
        grid=grid,
        in_specs=[
            pl.BlockSpec((tm, D), lambda i: (i, 0)),          # x rows (tiled, native f32)
            pl.BlockSpec((D, H1 + F1), lambda i: (0, 0)),     # fused first-layer weight
            pl.BlockSpec((1, H1 + F1), lambda i: (0, 0)),     # fused first-layer bias
            pl.BlockSpec((2, H1), lambda i: (0, 0)),          # LN gamma / beta
            pl.BlockSpec((H1, out_size), lambda i: (0, 0)),   # folded reg weight
            pl.BlockSpec((1, out_size), lambda i: (0, 0)),    # folded reg bias
            pl.BlockSpec((1, F1), lambda i: (0, 0)),          # folded cls weight row
        ],
        out_specs=(pl.BlockSpec((tm, out_size), lambda i: (i, 0)),
                   pl.BlockSpec((tm, 1), lambda i: (i, 0))),
        compiler_params=pltpu.CompilerParams(
            dimension_semantics=("parallel",),
            vmem_limit_bytes=64 * 1024 * 1024),
        cost_estimate=pl.CostEstimate(flops=flops, transcendentals=M,
                                      bytes_accessed=bytes_accessed),
    )(x2d, w_cat, b_cat, ln_gb, wr23_c, br23, wc_row)

    pred = pred2d.reshape(B, N, T, out_size // 2, 2)
    # log-softmax over T: tiny [B*N, T] op, done in plain jnp (no second
    # custom-call launch / masked writeback round trip).
    conf = jax.nn.log_softmax(logit2d.reshape(B, N, T), axis=-1)
    return pred, conf


# --------------------------------------------------------------------------- #
# Parameter init + pure-JAX f32 reference (mirrors the PyTorch module).        #
# --------------------------------------------------------------------------- #
def init_params(key, d_model, out_size, reg_h_dim=128, cls_h_dim=128):
    def lin(k, fan_in, fan_out):
        kw, kb = jax.random.split(k)
        s = 1.0 / (fan_in ** 0.5)
        w = jax.random.uniform(kw, (fan_in, fan_out), jnp.float32, -s, s)
        b = jax.random.uniform(kb, (1, fan_out), jnp.float32, -s, s)
        return w, b

    ks = jax.random.split(key, 9)
    p = {}
    p["wr1"], p["br1"] = lin(ks[0], d_model, 2 * reg_h_dim)
    p["ln_g"] = 1.0 + 0.1 * jax.random.normal(ks[1], (1, 2 * reg_h_dim), jnp.float32)
    p["ln_b"] = 0.1 * jax.random.normal(ks[2], (1, 2 * reg_h_dim), jnp.float32)
    p["wr2"], p["br2"] = lin(ks[3], 2 * reg_h_dim, reg_h_dim)
    p["wr3"], p["br3"] = lin(ks[4], reg_h_dim, out_size)
    p["wf1"], p["bf1"] = lin(ks[5], d_model, 2 * d_model)
    p["wf2"], p["bf2"] = lin(ks[6], 2 * d_model, d_model)
    p["wc1"], p["bc1"] = lin(ks[7], d_model, cls_h_dim)
    p["wc2"], p["bc2"] = lin(ks[8], cls_h_dim, 1)
    return p


def reference_forward(x, params):
    h = x @ params["wr1"] + params["br1"]
    mu = h.mean(-1, keepdims=True)
    var = ((h - mu) ** 2).mean(-1, keepdims=True)
    h = (h - mu) / jnp.sqrt(var + _LN_EPS) * params["ln_g"] + params["ln_b"]
    h = jnp.maximum(h, 0.0)
    h = h @ params["wr2"] + params["br2"]
    pred = h @ params["wr3"] + params["br3"]
    pred = pred.reshape(*pred.shape[:3], -1, 2)

    f = jnp.maximum(x @ params["wf1"] + params["bf1"], 0.0)
    f = f @ params["wf2"] + params["bf2"]
    c = f @ params["wc1"] + params["bc1"]
    c = (c @ params["wc2"] + params["bc2"])[..., 0]
    conf = jax.nn.log_softmax(c, axis=-1)
    return pred, conf


if __name__ == "__main__":
    # Small shapes consistent with the module: x is 4-D [B, N, T, d_model].
    B, N, T = 2, 3, 8
    d_model, out_size = 64, 12          # pred -> [B, N, T, 6, 2]

    key = jax.random.PRNGKey(0)
    kx, kp = jax.random.split(key)
    x = jax.random.normal(kx, (B, N, T, d_model), jnp.float32)
    params = init_params(kp, d_model, out_size)

    fwd = jax.jit(generator_with_parallel_heads)
    pred, conf = fwd(x, params)
    pred = jax.block_until_ready(pred)
    conf = jax.block_until_ready(conf)

    pred_ref, conf_ref = reference_forward(x, params)

    assert pred.shape == (B, N, T, out_size // 2, 2), pred.shape
    assert conf.shape == (B, N, T), conf.shape
    # bf16 MXU inputs (f32 accumulation) vs f32 reference -> modest tolerance.
    assert jnp.allclose(pred, pred_ref, atol=5e-2, rtol=5e-2), (
        "pred mismatch", float(jnp.max(jnp.abs(pred - pred_ref))))
    assert jnp.allclose(conf, conf_ref, atol=5e-2, rtol=5e-2), (
        "conf mismatch", float(jnp.max(jnp.abs(conf - conf_ref))))

    print("KERNEL_OK")
</pallas_src>

<mosaic_0001>
module attributes {stable_mosaic.version = 11 : i64} {
  func.func @_heads_kernel(%arg0: i32, %arg1: memref<32x64xf32, #tpu.memory_space<vmem>>, %arg2: memref<64x384xbf16, #tpu.memory_space<vmem>>, %arg3: memref<1x384xf32, #tpu.memory_space<vmem>>, %arg4: memref<2x256xf32, #tpu.memory_space<vmem>>, %arg5: memref<256x12xbf16, #tpu.memory_space<vmem>>, %arg6: memref<1x12xf32, #tpu.memory_space<vmem>>, %arg7: memref<1x128xf32, #tpu.memory_space<vmem>>, %arg8: memref<32x12xf32, #tpu.memory_space<vmem>>, %arg9: memref<32x1xf32, #tpu.memory_space<vmem>>) attributes {dimension_semantics = [#tpu.dimension_semantics<parallel>], iteration_bounds = array<i64: 2>, scalar_prefetch = 0 : i64, scratch_operands = 0 : i64, tpu.core_type = #tpu.core_type<tc>, window_params = [{transform_indices = @transform_0, window_bounds = array<i64: 32, 64>}, {pipeline_mode = #tpu.pipeline_mode<synchronous>, transform_indices = @transform_1, window_bounds = array<i64: 64, 384>}, {pipeline_mode = #tpu.pipeline_mode<synchronous>, transform_indices = @transform_2, window_bounds = array<i64: 1, 384>}, {pipeline_mode = #tpu.pipeline_mode<synchronous>, transform_indices = @transform_3, window_bounds = array<i64: 2, 256>}, {pipeline_mode = #tpu.pipeline_mode<synchronous>, transform_indices = @transform_4, window_bounds = array<i64: 256, 12>}, {pipeline_mode = #tpu.pipeline_mode<synchronous>, transform_indices = @transform_5, window_bounds = array<i64: 1, 12>}, {pipeline_mode = #tpu.pipeline_mode<synchronous>, transform_indices = @transform_6, window_bounds = array<i64: 1, 128>}, {transform_indices = @transform_7, window_bounds = array<i64: 32, 12>}, {transform_indices = @transform_8, window_bounds = array<i64: 32, 1>}]} {
    %c0 = arith.constant 0 : index
    %c0_0 = arith.constant 0 : index
    %0 = vector.load %arg1[%c0, %c0_0] : memref<32x64xf32, #tpu.memory_space<vmem>>, vector<32x64xf32>
    %1 = arith.truncf %0 : vector<32x64xf32> to vector<32x64xbf16>
    %c0_1 = arith.constant 0 : index
    %c0_2 = arith.constant 0 : index
    %2 = vector.load %arg2[%c0_1, %c0_2] : memref<64x384xbf16, #tpu.memory_space<vmem>>, vector<64x384xbf16>
    %cst = arith.constant dense<0.000000e+00> : vector<32x384xf32>
    %3 = tpu.matmul %1, %2, %cst {dimension_numbers = #tpu.dot_dimension_numbers<[1], [0], [0], [1], [0, 0, 1, 1], [], []>} : vector<32x64xbf16>, vector<64x384xbf16>, vector<32x384xf32> -> vector<32x384xf32>
    %c0_3 = arith.constant 0 : index
    %c0_4 = arith.constant 0 : index
    %4 = vector.load %arg3[%c0_3, %c0_4] : memref<1x384xf32, #tpu.memory_space<vmem>>, vector<1x384xf32>
    %5 = vector.broadcast %4 : vector<1x384xf32> to vector<32x384xf32>
    %6 = arith.addf %3, %5 : vector<32x384xf32>
    %7 = vector.extract_strided_slice %6 {offsets = [0, 0], sizes = [32, 256], strides = [1, 1]} : vector<32x384xf32> to vector<32x256xf32>
    %8 = vector.extract_strided_slice %6 {offsets = [0, 256], sizes = [32, 128], strides = [1, 1]} : vector<32x384xf32> to vector<32x128xf32>
    %c0_5 = arith.constant 0 : index
    %c0_6 = arith.constant 0 : index
    %9 = vector.load %arg4[%c0_5, %c0_6] : memref<2x256xf32, #tpu.memory_space<vmem>>, vector<2x256xf32>
    %cst_7 = arith.constant dense<0.000000e+00> : vector<32xf32>
    %10 = vector.multi_reduction <add>, %7, %cst_7 [1] : vector<32x256xf32> to vector<32xf32>
    %11 = vector.shape_cast %10 : vector<32xf32> to vector<32x1xf32>
    %cst_8 = arith.constant 2.560000e+02 : f32
    %12 = vector.broadcast %cst_8 : f32 to vector<32x1xf32>
    %13 = arith.divf %11, %12 : vector<32x1xf32>
    %14 = vector.broadcast %13 : vector<32x1xf32> to vector<32x256xf32>
    %15 = arith.subf %7, %14 : vector<32x256xf32>
    %16 = arith.mulf %15, %15 : vector<32x256xf32>
    %cst_9 = arith.constant dense<0.000000e+00> : vector<32xf32>
    %17 = vector.multi_reduction <add>, %16, %cst_9 [1] : vector<32x256xf32> to vector<32xf32>
    %18 = vector.shape_cast %17 : vector<32xf32> to vector<32x1xf32>
    %cst_10 = arith.constant 2.560000e+02 : f32
    %19 = vector.broadcast %cst_10 : f32 to vector<32x1xf32>
    %20 = arith.divf %18, %19 : vector<32x1xf32>
    %cst_11 = arith.constant 9.99999974E-6 : f32
    %21 = vector.broadcast %cst_11 : f32 to vector<32x1xf32>
    %22 = arith.addf %20, %21 : vector<32x1xf32>
    %23 = math.rsqrt %22 : vector<32x1xf32>
    %24 = vector.broadcast %23 : vector<32x1xf32> to vector<32x256xf32>
    %25 = arith.mulf %15, %24 : vector<32x256xf32>
    %26 = vector.extract_strided_slice %9 {offsets = [0, 0], sizes = [1, 256], strides = [1, 1]} : vector<2x256xf32> to vector<1x256xf32>
    %27 = vector.broadcast %26 : vector<1x256xf32> to vector<32x256xf32>
    %28 = arith.mulf %25, %27 : vector<32x256xf32>
    %29 = vector.extract_strided_slice %9 {offsets = [1, 0], sizes = [1, 256], strides = [1, 1]} : vector<2x256xf32> to vector<1x256xf32>
    %30 = vector.broadcast %29 : vector<1x256xf32> to vector<32x256xf32>
    %31 = arith.addf %28, %30 : vector<32x256xf32>
    %cst_12 = arith.constant 0.000000e+00 : f32
    %32 = vector.broadcast %cst_12 : f32 to vector<32x256xf32>
    %33 = arith.maximumf %31, %32 : vector<32x256xf32>
    %34 = arith.truncf %33 : vector<32x256xf32> to vector<32x256xbf16>
    %c0_13 = arith.constant 0 : index
    %c0_14 = arith.constant 0 : index
    %35 = vector.load %arg5[%c0_13, %c0_14] : memref<256x12xbf16, #tpu.memory_space<vmem>>, vector<256x12xbf16>
    %cst_15 = arith.constant dense<0.000000e+00> : vector<32x12xf32>
    %36 = tpu.matmul %34, %35, %cst_15 {dimension_numbers = #tpu.dot_dimension_numbers<[1], [0], [0], [1], [0, 0, 1, 1], [], []>} : vector<32x256xbf16>, vector<256x12xbf16>, vector<32x12xf32> -> vector<32x12xf32>
    %c0_16 = arith.constant 0 : index
    %c0_17 = arith.constant 0 : index
    %37 = vector.load %arg6[%c0_16, %c0_17] : memref<1x12xf32, #tpu.memory_space<vmem>>, vector<1x12xf32>
    %38 = vector.broadcast %37 : vector<1x12xf32> to vector<32x12xf32>
    %39 = arith.addf %36, %38 : vector<32x12xf32>
    %c0_18 = arith.constant 0 : index
    %c0_19 = arith.constant 0 : index
    %40 = vector.load %arg8[%c0_18, %c0_19] : memref<32x12xf32, #tpu.memory_space<vmem>>, vector<32x12xf32>
    tpu.vector_store %arg8[%c0_18, %c0_19], %39 {strides = array<i32>} : memref<32x12xf32, #tpu.memory_space<vmem>>, vector<32x12xf32>,
    %cst_20 = arith.constant 0.000000e+00 : f32
    %41 = vector.broadcast %cst_20 : f32 to vector<32x128xf32>
    %42 = arith.maximumf %8, %41 : vector<32x128xf32>
    %c0_21 = arith.constant 0 : index
    %c0_22 = arith.constant 0 : index
    %43 = vector.load %arg7[%c0_21, %c0_22] : memref<1x128xf32, #tpu.memory_space<vmem>>, vector<1x128xf32>
    %44 = vector.broadcast %43 : vector<1x128xf32> to vector<32x128xf32>
    %45 = arith.mulf %42, %44 : vector<32x128xf32>
    %cst_23 = arith.constant dense<0.000000e+00> : vector<32xf32>
    %46 = vector.multi_reduction <add>, %45, %cst_23 [1] : vector<32x128xf32> to vector<32xf32>
    %47 = vector.shape_cast %46 : vector<32xf32> to vector<32x1xf32>
    %c0_24 = arith.constant 0 : index
    %c0_25 = arith.constant 0 : index
    %48 = vector.load %arg9[%c0_24, %c0_25] : memref<32x1xf32, #tpu.memory_space<vmem>>, vector<32x1xf32>
    tpu.vector_store %arg9[%c0_24, %c0_25], %47 {strides = array<i32>} : memref<32x1xf32, #tpu.memory_space<vmem>>, vector<32x1xf32>,
    return
  }
  func.func @transform_0(%arg0: i32) -> (i32, i32) {
    %c0_i32 = arith.constant 0 : i32
    %c0_i32_0 = arith.constant 0 : i32
    return %arg0, %c0_i32 : i32, i32
  }
  func.func @transform_1(%arg0: i32) -> (i32, i32) {
    %c0_i32 = arith.constant 0 : i32
    %c0_i32_0 = arith.constant 0 : i32
    %c0_i32_1 = arith.constant 0 : i32
    return %c0_i32, %c0_i32_0 : i32, i32
  }
  func.func @transform_2(%arg0: i32) -> (i32, i32) {
    %c0_i32 = arith.constant 0 : i32
    %c0_i32_0 = arith.constant 0 : i32
    %c0_i32_1 = arith.constant 0 : i32
    return %c0_i32, %c0_i32_0 : i32, i32
  }
  func.func @transform_3(%arg0: i32) -> (i32, i32) {
    %c0_i32 = arith.constant 0 : i32
    %c0_i32_0 = arith.constant 0 : i32
    %c0_i32_1 = arith.constant 0 : i32
    return %c0_i32, %c0_i32_0 : i32, i32
  }
  func.func @transform_4(%arg0: i32) -> (i32, i32) {
    %c0_i32 = arith.constant 0 : i32
    %c0_i32_0 = arith.constant 0 : i32
    %c0_i32_1 = arith.constant 0 : i32
    return %c0_i32, %c0_i32_0 : i32, i32
  }
  func.func @transform_5(%arg0: i32) -> (i32, i32) {
    %c0_i32 = arith.constant 0 : i32
    %c0_i32_0 = arith.constant 0 : i32
    %c0_i32_1 = arith.constant 0 : i32
    return %c0_i32, %c0_i32_0 : i32, i32
  }
  func.func @transform_6(%arg0: i32) -> (i32, i32) {
    %c0_i32 = arith.constant 0 : i32
    %c0_i32_0 = arith.constant 0 : i32
    %c0_i32_1 = arith.constant 0 : i32
    return %c0_i32, %c0_i32_0 : i32, i32
  }
  func.func @transform_7(%arg0: i32) -> (i32, i32) {
    %c0_i32 = arith.constant 0 : i32
    %c0_i32_0 = arith.constant 0 : i32
    return %arg0, %c0_i32 : i32, i32
  }
  func.func @transform_8(%arg0: i32) -> (i32, i32) {
    %c0_i32 = arith.constant 0 : i32
    %c0_i32_0 = arith.constant 0 : i32
    return %arg0, %c0_i32 : i32, i32
  }
}

</mosaic_0001>

<llo_original>
// kernel: generator_with_parallel_heads.1
$region0: #{generator_with_parallel_heads.1}
  #allocation0 [shape = 'u32[]', space=smem, size = 0x4, offset = 0x4, fixed_abs, tag = 'smem constant byte address 0x4 - core index']
  #allocation1 [shape = 'u32[144,128]{1,0:T(1,128)}', space=vmem, size = 0x12000, scoped, tag = 'internal scratch']
  %s0 = inlined_call_operand.hbm [shape: f32[48,64], index: 0, kind: input, shape index: {}]
  %s1 = inlined_call_operand.hbm [shape: bf16[64,384], index: 1, kind: input, shape index: {}]
  %s2 = inlined_call_operand.hbm [shape: f32[1,384], index: 2, kind: input, shape index: {}]
  %s3 = inlined_call_operand.hbm [shape: f32[2,256], index: 3, kind: input, shape index: {}]
  %s4 = inlined_call_operand.hbm [shape: bf16[256,12], index: 4, kind: input, shape index: {}]
  %s5 = inlined_call_operand.hbm [shape: f32[1,12], index: 5, kind: input, shape index: {}]
  %s6 = inlined_call_operand.hbm [shape: f32[1,128], index: 6, kind: input, shape index: {}]
  %s7 = inlined_call_operand.hbm [shape: f32[48,12], index: 7, kind: output, shape index: {0}]
  %s8 = inlined_call_operand.hbm [shape: f32[48,1], index: 8, kind: output, shape index: {1}]
  %9 = xla_tuple %s7, %s8
  %s10 = sld [smem:[#allocation0]]
  $region97: #{generator_with_parallel_heads.1} parent=0
    _
  %s12 = ssub.s32 1, %s10
  %s13 = scalar_select 0, %s12, %s10
  $region1: #{generator_with_parallel_heads.1} parent=0
    #allocation2 [shape = 'u8[32768]{0}', space=vmem, size = 0x8000, scoped, tag = 'input window, operand 0']
    #allocation3 [shape = 's32[2]{0}', space=sflag, size = 0x8, scoped, tag = 'scoped memory for generator_with_parallel_heads.1']
    #allocation4 [shape = 's32[2]{0}', space=sflag, size = 0x8, scoped, tag = 'scoped memory for generator_with_parallel_heads.1']
    #allocation5 [shape = 'u8[49152]{0}', space=vmem, size = 0xc000, scoped, tag = 'input window, operand 1, single buffered']
    #allocation6 [shape = 's32[1]{0}', space=sflag, size = 0x4, scoped, tag = 'scoped memory for generator_with_parallel_heads.1']
    #allocation7 [shape = 'u8[1536]{0}', space=vmem, size = 0x800, scoped, tag = 'input window, operand 2, single buffered']
    #allocation8 [shape = 'u8[2048]{0}', space=vmem, size = 0x800, scoped, tag = 'input window, operand 3, single buffered']
    #allocation9 [shape = 's32[1]{0}', space=sflag, size = 0x4, scoped, tag = 'scoped memory for generator_with_parallel_heads.1']
    #allocation10 [shape = 'u8[65536]{0}', space=vmem, size = 0x10000, scoped, tag = 'input window, operand 4, single buffered']
    #allocation11 [shape = 'u8[512]{0}', space=vmem, size = 0x400, scoped, tag = 'input window, operand 5, single buffered']
    #allocation12 [shape = 's32[1]{0}', space=sflag, size = 0x4, scoped, tag = 'scoped memory for generator_with_parallel_heads.1']
    #allocation13 [shape = 'u8[512]{0}', space=vmem, size = 0x400, scoped, tag = 'input window, operand 6, single buffered']
    #allocation14 [shape = 'u8[32768]{0}', space=vmem, size = 0x8000, scoped, tag = 'output window, operand 0']
    #allocation15 [shape = 'u8[32768]{0}', space=vmem, size = 0x8000, scoped, tag = 'output window, operand 1']
    #allocation16 [shape = 's32[2]{0}', space=sflag, size = 0x8, scoped, tag = 'scoped memory for generator_with_parallel_heads.1']
    %14 = vsyncpa [#allocation3], 0
    %s15 = scalar_lea.sflag [#allocation3], 1
    %16 = vsyncpa %s15, 0
    %17 = vsyncpa [#allocation6], 0
    %18 = vsyncpa [#allocation9], 0
    %19 = vsyncpa [#allocation12], 0
    %20 = vsyncpa [#allocation4], 0
    %s21 = scalar_lea.sflag [#allocation4], 1
    %22 = vsyncpa %s21, 0
    %23 = vsyncpa [#allocation16], 0
    %s24 = scalar_lea.sflag [#allocation16], 1
    %25 = vsyncpa %s24, 0
    loop: start=0, step=1, limit=4
    $region2: #{generator_with_parallel_heads.1} parent=1 // loop_pre_header
      _
    $region3: #{generator_with_parallel_heads.1} parent=1 // loop_header
      %s27 = sphi 0, %s31
      %p28 = scmp.ge.s32.totalorder %s27, 4
      %s37 = sphi 0, %s39
      %s40 = sphi 0, %s37
      %s41 = sphi 0, %s40
      %s57 = sphi 0, %s41
      %s61 = sphi 0, %s61
      %s63 = sphi 0, %s61
      %s64 = sphi 0, %s63
      %s78 = sphi 0, %s64
      %s82 = sphi 0, %s82
      %s84 = sphi 0, %s82
      %s85 = sphi 0, %s84
      %s99 = sphi 0, %s85
      %s103 = sphi 0, %s103
      %s105 = sphi 0, %s103
      %s106 = sphi 0, %s105
      %s120 = sphi 0, %s106
      %s124 = sphi 0, %s124
      %s126 = sphi 0, %s124
      %s127 = sphi 0, %s126
      %s141 = sphi 0, %s127
      %s145 = sphi 0, %s145
      %s147 = sphi 0, %s145
      %s148 = sphi 0, %s147
      %s162 = sphi 0, %s148
      %s166 = sphi 0, %s166
      %s168 = sphi 0, %s166
      %s169 = sphi 0, %s168
      %s183 = sphi 0, %s169
      %s189 = sphi 0, %s191
      %s192 = sphi 0, %s189
      %s193 = sphi 0, %s192
      %s209 = sphi 0, %s193
      %s215 = sphi 0, %s217
      %s218 = sphi 0, %s215
      %s219 = sphi 0, %s218
      %s235 = sphi 0, %s219
    $region4: #{generator_with_parallel_heads.1} parent=1 // loop_header_branch
      %30 = sbr.rel (%p28) target = $region8
    $region5: #{generator_with_parallel_heads.1} parent=1 // loop_body
      %s32 = ssub.s32 %s27, 1
      %s33 = ssub.s32 %s27, 2
      %s34 = sadd.s32 %s27, 1
      %s35 = ssub.s32 %s27, %s34
      %p36 = scmp.eq.s32.totalorder %s35, 0
      %s38 = sadd.s32 %s37, 1
      %s39 = scalar_select %p36, %s37, %s38
      %p42 = pneg %p36
      %p43 = scmp.eq.s32.totalorder %s27, 1
      %p44 = por %p42, %p43
      %p45 = scmp.ne.s32.totalorder %s37, %s40
      %p46 = scmp.eq.s32.totalorder %s27, 0
      %p47 = por %p45, %p46
      %p48 = scmp.ne.s32.totalorder %s37, %s40
      %p49 = scmp.eq.s32.totalorder %s32, 1
      %p50 = por %p48, %p49
      %p51 = scmp.ne.s32.totalorder %s40, %s41
      %p52 = scmp.eq.s32.totalorder %s32, 0
      %p53 = por %p51, %p52
      %p54 = scmp.ne.s32.totalorder %s40, %s41
      %p55 = scmp.eq.s32.totalorder %s33, 1
      %p56 = por %p54, %p55
      %p58 = scmp.ne.s32.totalorder %s41, %s57
      %p59 = scmp.eq.s32.totalorder %s33, 0
      %p60 = por %p58, %p59
      %s62 = sadd.s32 %s61, 1
      %p65 = scmp.eq.s32.totalorder %s27, 1
      %p66 = scmp.ne.s32.totalorder %s61, %s63
      %p67 = scmp.eq.s32.totalorder %s27, 0
      %p68 = por %p66, %p67
      %p69 = scmp.ne.s32.totalorder %s61, %s63
      %p70 = scmp.eq.s32.totalorder %s32, 1
      %p71 = por %p69, %p70
      %p72 = scmp.ne.s32.totalorder %s63, %s64
      %p73 = scmp.eq.s32.totalorder %s32, 0
      %p74 = por %p72, %p73
      %p75 = scmp.ne.s32.totalorder %s63, %s64
      %p76 = scmp.eq.s32.totalorder %s33, 1
      %p77 = por %p75, %p76
      %p79 = scmp.ne.s32.totalorder %s64, %s78
      %p80 = scmp.eq.s32.totalorder %s33, 0
      %p81 = por %p79, %p80
      %s83 = sadd.s32 %s82, 1
      %p86 = scmp.eq.s32.totalorder %s27, 1
      %p87 = scmp.ne.s32.totalorder %s82, %s84
      %p88 = scmp.eq.s32.totalorder %s27, 0
      %p89 = por %p87, %p88
      %p90 = scmp.ne.s32.totalorder %s82, %s84
      %p91 = scmp.eq.s32.totalorder %s32, 1
      %p92 = por %p90, %p91
      %p93 = scmp.ne.s32.totalorder %s84, %s85
      %p94 = scmp.eq.s32.totalorder %s32, 0
      %p95 = por %p93, %p94
      %p96 = scmp.ne.s32.totalorder %s84, %s85
      %p97 = scmp.eq.s32.totalorder %s33, 1
      %p98 = por %p96, %p97
      %p100 = scmp.ne.s32.totalorder %s85, %s99
      %p101 = scmp.eq.s32.totalorder %s33, 0
      %p102 = por %p100, %p101
      %s104 = sadd.s32 %s103, 1
      %p107 = scmp.eq.s32.totalorder %s27, 1
      %p108 = scmp.ne.s32.totalorder %s103, %s105
      %p109 = scmp.eq.s32.totalorder %s27, 0
      %p110 = por %p108, %p109
      %p111 = scmp.ne.s32.totalorder %s103, %s105
      %p112 = scmp.eq.s32.totalorder %s32, 1
      %p113 = por %p111, %p112
      %p114 = scmp.ne.s32.totalorder %s105, %s106
      %p115 = scmp.eq.s32.totalorder %s32, 0
      %p116 = por %p114, %p115
      %p117 = scmp.ne.s32.totalorder %s105, %s106
      %p118 = scmp.eq.s32.totalorder %s33, 1
      %p119 = por %p117, %p118
      %p121 = scmp.ne.s32.totalorder %s106, %s120
      %p122 = scmp.eq.s32.totalorder %s33, 0
      %p123 = por %p121, %p122
      %s125 = sadd.s32 %s124, 1
      %p128 = scmp.eq.s32.totalorder %s27, 1
      %p129 = scmp.ne.s32.totalorder %s124, %s126
      %p130 = scmp.eq.s32.totalorder %s27, 0
      %p131 = por %p129, %p130
      %p132 = scmp.ne.s32.totalorder %s124, %s126
      %p133 = scmp.eq.s32.totalorder %s32, 1
      %p134 = por %p132, %p133
      %p135 = scmp.ne.s32.totalorder %s126, %s127
      %p136 = scmp.eq.s32.totalorder %s32, 0
      %p137 = por %p135, %p136
      %p138 = scmp.ne.s32.totalorder %s126, %s127
      %p139 = scmp.eq.s32.totalorder %s33, 1
      %p140 = por %p138, %p139
      %p142 = scmp.ne.s32.totalorder %s127, %s141
      %p143 = scmp.eq.s32.totalorder %s33, 0
      %p144 = por %p142, %p143
      %s146 = sadd.s32 %s145, 1
      %p149 = scmp.eq.s32.totalorder %s27, 1
      %p150 = scmp.ne.s32.totalorder %s145, %s147
      %p151 = scmp.eq.s32.totalorder %s27, 0
      %p152 = por %p150, %p151
      %p153 = scmp.ne.s32.totalorder %s145, %s147
      %p154 = scmp.eq.s32.totalorder %s32, 1
      %p155 = por %p153, %p154
      %p156 = scmp.ne.s32.totalorder %s147, %s148
      %p157 = scmp.eq.s32.totalorder %s32, 0
      %p158 = por %p156, %p157
      %p159 = scmp.ne.s32.totalorder %s147, %s148
      %p160 = scmp.eq.s32.totalorder %s33, 1
      %p161 = por %p159, %p160
      %p163 = scmp.ne.s32.totalorder %s148, %s162
      %p164 = scmp.eq.s32.totalorder %s33, 0
      %p165 = por %p163, %p164
      %s167 = sadd.s32 %s166, 1
      %p170 = scmp.eq.s32.totalorder %s27, 1
      %p171 = scmp.ne.s32.totalorder %s166, %s168
      %p172 = scmp.eq.s32.totalorder %s27, 0
      %p173 = por %p171, %p172
      %p174 = scmp.ne.s32.totalorder %s166, %s168
      %p175 = scmp.eq.s32.totalorder %s32, 1
      %p176 = por %p174, %p175
      %p177 = scmp.ne.s32.totalorder %s168, %s169
      %p178 = scmp.eq.s32.totalorder %s32, 0
      %p179 = por %p177, %p178
      %p180 = scmp.ne.s32.totalorder %s168, %s169
      %p181 = scmp.eq.s32.totalorder %s33, 1
      %p182 = por %p180, %p181
      %p184 = scmp.ne.s32.totalorder %s169, %s183
      %p185 = scmp.eq.s32.totalorder %s33, 0
      %p186 = por %p184, %p185
      %s187 = ssub.s32 %s27, %s34
      %p188 = scmp.eq.s32.totalorder %s187, 0
      %s190 = sadd.s32 %s189, 1
      %s191 = scalar_select %p188, %s189, %s190
      %p194 = pneg %p188
      %p195 = scmp.eq.s32.totalorder %s27, 1
      %p196 = por %p194, %p195
      %p197 = scmp.ne.s32.totalorder %s189, %s192
      %p198 = scmp.eq.s32.totalorder %s27, 0
      %p199 = por %p197, %p198
      %p200 = scmp.ne.s32.totalorder %s189, %s192
      %p201 = scmp.eq.s32.totalorder %s32, 1
      %p202 = por %p200, %p201
      %p203 = scmp.ne.s32.totalorder %s192, %s193
      %p204 = scmp.eq.s32.totalorder %s32, 0
      %p205 = por %p203, %p204
      %p206 = scmp.ne.s32.totalorder %s192, %s193
      %p207 = scmp.eq.s32.totalorder %s33, 1
      %p208 = por %p206, %p207
      %p210 = scmp.ne.s32.totalorder %s193, %s209
      %p211 = scmp.eq.s32.totalorder %s33, 0
      %p212 = por %p210, %p211
      %s213 = ssub.s32 %s27, %s34
      %p214 = scmp.eq.s32.totalorder %s213, 0
      %s216 = sadd.s32 %s215, 1
      %s217 = scalar_select %p214, %s215, %s216
      %p220 = pneg %p214
      %p221 = scmp.eq.s32.totalorder %s27, 1
      %p222 = por %p220, %p221
      %p223 = scmp.ne.s32.totalorder %s215, %s218
      %p224 = scmp.eq.s32.totalorder %s27, 0
      %p225 = por %p223, %p224
      %p226 = scmp.ne.s32.totalorder %s215, %s218
      %p227 = scmp.eq.s32.totalorder %s32, 1
      %p228 = por %p226, %p227
      %p229 = scmp.ne.s32.totalorder %s218, %s219
      %p230 = scmp.eq.s32.totalorder %s32, 0
      %p231 = por %p229, %p230
      %p232 = scmp.ne.s32.totalorder %s218, %s219
      %p233 = scmp.eq.s32.totalorder %s33, 1
      %p234 = por %p232, %p233
      %p236 = scmp.ne.s32.totalorder %s219, %s235
      %p237 = scmp.eq.s32.totalorder %s33, 0
      %p238 = por %p236, %p237
      %p239 = scmp.le.s32.totalorder 1, %s27
      %p240 = scmp.lt.s32.totalorder %s27, 3
      %p241 = pnand %p239, %p240
      %p242 = pneg %p241
      // Predicated region
      $region9: #{generator_with_parallel_heads.1} parent=5 // pred_check
        _
      $region10: #{generator_with_parallel_heads.1} parent=5 // pred_check_branch
        %244 = sbr.rel (%p241) target = $region12
      $region11: #{generator_with_parallel_heads.1} parent=5 // pred_region
        %s245 = ssub.s32 %s27, 1
        // Predicated region
        $region13: #{generator_with_parallel_heads.1} parent=11 // pred_check
          %p246 = pneg %p74
        $region14: #{generator_with_parallel_heads.1} parent=11 // pred_check_branch
          %248 = sbr.rel (%p246) target = $region16
        $region15: #{generator_with_parallel_heads.1} parent=11 // pred_region
          %s250 = ssub.s32 1536, 1536
          %251 = vsyncadd [#allocation6], %s250
          %s252 = sshll.u32 [#allocation5], 4
          %s253 = int_to_ptr.vmem [resolvable:$true] %s252
          %258 = dma.hbm_to_vmem [thread:$0]  %s1, 1536, %s253, [#allocation6], 192, 192, 12
        $region16: #{generator_with_parallel_heads.1} parent=11 // pred_fallthru
          _
        // Predicated region
        $region17: #{generator_with_parallel_heads.1} parent=11 // pred_check
          %p259 = pneg %p95
        $region18: #{generator_with_parallel_heads.1} parent=11 // pred_check_branch
          %261 = sbr.rel (%p259) target = $region20
        $region19: #{generator_with_parallel_heads.1} parent=11 // pred_region
          %s263 = ssub.s32 48, 48
          %264 = vsyncadd [#allocation6], %s263
          %s266 = sshll.u32 [#allocation7], 4
          %s267 = int_to_ptr.vmem [resolvable:$true] %s266
          %269 = dma.hbm_to_vmem [thread:$0]  %s2, 48, %s267, [#allocation6]
        $region20: #{generator_with_parallel_heads.1} parent=11 // pred_fallthru
          _
        // Predicated region
        $region21: #{generator_with_parallel_heads.1} parent=11 // pred_check
          %p270 = pneg %p116
        $region22: #{generator_with_parallel_heads.1} parent=11 // pred_check_branch
          %272 = sbr.rel (%p270) target = $region24
        $region23: #{generator_with_parallel_heads.1} parent=11 // pred_region
          %s274 = ssub.s32 64, 64
          %275 = vsyncadd [#allocation9], %s274
          %s277 = sshll.u32 [#allocation8], 4
          %s278 = int_to_ptr.vmem [resolvable:$true] %s277
          %280 = dma.hbm_to_vmem [thread:$0]  %s3, 64, %s278, [#allocation9]
        $region24: #{generator_with_parallel_heads.1} parent=11 // pred_fallthru
          _
        // Predicated region
        $region25: #{generator_with_parallel_heads.1} parent=11 // pred_check
          %p281 = pneg %p137
        $region26: #{generator_with_parallel_heads.1} parent=11 // pred_check_branch
          %283 = sbr.rel (%p281) target = $region28
        $region27: #{generator_with_parallel_heads.1} parent=11 // pred_region
          %s285 = ssub.s32 2048, 2048
          %286 = vsyncadd [#allocation9], %s285
          %s287 = sshll.u32 [#allocation10], 4
          %s288 = int_to_ptr.vmem [resolvable:$true] %s287
          %293 = dma.hbm_to_vmem [thread:$0]  %s4, 2048, %s288, [#allocation9], 64, 64, 4
        $region28: #{generator_with_parallel_heads.1} parent=11 // pred_fallthru
          _
        // Predicated region
        $region29: #{generator_with_parallel_heads.1} parent=11 // pred_check
          %p294 = pneg %p158
        $region30: #{generator_with_parallel_heads.1} parent=11 // pred_check_branch
          %296 = sbr.rel (%p294) target = $region32
        $region31: #{generator_with_parallel_heads.1} parent=11 // pred_region
          %s298 = ssub.s32 16, 16
          %299 = vsyncadd [#allocation12], %s298
          %s301 = sshll.u32 [#allocation11], 4
          %s302 = int_to_ptr.vmem [resolvable:$true] %s301
          %304 = dma.hbm_to_vmem [thread:$0]  %s5, 16, %s302, [#allocation12]
        $region32: #{generator_with_parallel_heads.1} parent=11 // pred_fallthru
          _
        // Predicated region
        $region33: #{generator_with_parallel_heads.1} parent=11 // pred_check
          %p305 = pneg %p179
        $region34: #{generator_with_parallel_heads.1} parent=11 // pred_check_branch
          %307 = sbr.rel (%p305) target = $region36
        $region35: #{generator_with_parallel_heads.1} parent=11 // pred_region
          %s309 = ssub.s32 16, 16
          %310 = vsyncadd [#allocation12], %s309
          %s312 = sshll.u32 [#allocation13], 4
          %s313 = int_to_ptr.vmem [resolvable:$true] %s312
          %315 = dma.hbm_to_vmem [thread:$0]  %s6, 16, %s313, [#allocation12]
        $region36: #{generator_with_parallel_heads.1} parent=11 // pred_fallthru
          _
      $region12: #{generator_with_parallel_heads.1} parent=5 // pred_fallthru
        _
      %p316 = scmp.lt.s32.totalorder %s27, 2
      // Predicated region
      $region37: #{generator_with_parallel_heads.1} parent=5 // pred_check
        %p317 = pneg %p316
      $region38: #{generator_with_parallel_heads.1} parent=5 // pred_check_branch
        %319 = sbr.rel (%p317) target = $region40
      $region39: #{generator_with_parallel_heads.1} parent=5 // pred_region
        // Predicated region
        $region41: #{generator_with_parallel_heads.1} parent=39 // pred_check
          %p320 = pneg %p47
        $region42: #{generator_with_parallel_heads.1} parent=39 // pred_check_branch
          %322 = sbr.rel (%p320) target = $region44
        $region43: #{generator_with_parallel_heads.1} parent=39 // pred_region
          %s323 = sand.u32 %s37, 1
          %s324 = scalar_lea.sflag [#allocation3], %s323
          %s325 = sand.u32 %s37, 1
          %s326 = smul.addr %s325, 32
          %s327 = scalar_lea.vmem [#allocation2], %s326
          %s328 = smul.u32 4, %s27
          %s329 = ssub.s32 6, %s328
          %p330 = scmp.lt.s32.totalorder %s329, 4
          %s331 = scalar_select %p330, %s329, 4
          %s332 = smul.u32 128, %s331
          %s334 = ssub.s32 512, %s332
          %335 = vsyncadd %s324, %s334
          %p336 = scmp.ne.s32.totalorder 0, %s332
          %s337 = smul.addr %s328, 128
          %s338 = scalar_lea.hbm %s0, %s337
          %s339 = smul.u32 8, %s331
          %s340 = sshll.u32 %s327, 4
          %s341 = int_to_ptr.vmem [resolvable:$true] %s340
          %s342 = sshll.u32 %s339, 4
          %346 = dma.hbm_to_vmem [thread:$0]  (%p336), %s338, %s342, %s341, %s324, 128, 128, 8
        $region44: #{generator_with_parallel_heads.1} parent=39 // pred_fallthru
          _
      $region40: #{generator_with_parallel_heads.1} parent=5 // pred_fallthru
        _
      %p347 = scmp.le.s32.totalorder 1, %s27
      %p348 = scmp.lt.s32.totalorder %s27, 3
      %p349 = pnand %p347, %p348
      %p350 = pneg %p349
      // Predicated region
      $region45: #{generator_with_parallel_heads.1} parent=5 // pred_check
        _
      $region46: #{generator_with_parallel_heads.1} parent=5 // pred_check_branch
        %352 = sbr.rel (%p349) target = $region48
      $region47: #{generator_with_parallel_heads.1} parent=5 // pred_region
        %s353 = ssub.s32 %s27, 1
        %s354 = sand.u32 %s40, 1
        %s355 = scalar_lea.sflag [#allocation3], %s354
        %s356 = sand.u32 %s40, 1
        %s357 = smul.addr %s356, 32
        %s358 = scalar_lea.vmem [#allocation2], %s357
        // Predicated region
        $region49: #{generator_with_parallel_heads.1} parent=47 // pred_check
          %p359 = pneg %p53
        $region50: #{generator_with_parallel_heads.1} parent=47 // pred_check_branch
          %361 = sbr.rel (%p359) target = $region52
        $region51: #{generator_with_parallel_heads.1} parent=47 // pred_region
          %362 = dma.done %s355, 512
        $region52: #{generator_with_parallel_heads.1} parent=47 // pred_fallthru
          _
        // Predicated region
        $region53: #{generator_with_parallel_heads.1} parent=47 // pred_check
          %p363 = pneg %p74
        $region54: #{generator_with_parallel_heads.1} parent=47 // pred_check_branch
          %365 = sbr.rel (%p363) target = $region56
        $region55: #{generator_with_parallel_heads.1} parent=47 // pred_region
          %366 = dma.done [#allocation6], 1536
        $region56: #{generator_with_parallel_heads.1} parent=47 // pred_fallthru
          _
        // Predicated region
        $region57: #{generator_with_parallel_heads.1} parent=47 // pred_check
          %p367 = pneg %p95
        $region58: #{generator_with_parallel_heads.1} parent=47 // pred_check_branch
          %369 = sbr.rel (%p367) target = $region60
        $region59: #{generator_with_parallel_heads.1} parent=47 // pred_region
          %370 = dma.done [#allocation6], 48
        $region60: #{generator_with_parallel_heads.1} parent=47 // pred_fallthru
          _
        // Predicated region
        $region61: #{generator_with_parallel_heads.1} parent=47 // pred_check
          %p371 = pneg %p116
        $region62: #{generator_with_parallel_heads.1} parent=47 // pred_check_branch
          %373 = sbr.rel (%p371) target = $region64
        $region63: #{generator_with_parallel_heads.1} parent=47 // pred_region
          %374 = dma.done [#allocation9], 64
        $region64: #{generator_with_parallel_heads.1} parent=47 // pred_fallthru
          _
        // Predicated region
        $region65: #{generator_with_parallel_heads.1} parent=47 // pred_check
          %p375 = pneg %p137
        $region66: #{generator_with_parallel_heads.1} parent=47 // pred_check_branch
          %377 = sbr.rel (%p375) target = $region68
        $region67: #{generator_with_parallel_heads.1} parent=47 // pred_region
          %378 = dma.done [#allocation9], 2048
        $region68: #{generator_with_parallel_heads.1} parent=47 // pred_fallthru
          _
        // Predicated region
        $region69: #{generator_with_parallel_heads.1} parent=47 // pred_check
          %p379 = pneg %p158
        $region70: #{generator_with_parallel_heads.1} parent=47 // pred_check_branch
          %381 = sbr.rel (%p379) target = $region72
        $region71: #{generator_with_parallel_heads.1} parent=47 // pred_region
          %382 = dma.done [#allocation12], 16
        $region72: #{generator_with_parallel_heads.1} parent=47 // pred_fallthru
          _
        // Predicated region
        $region73: #{generator_with_parallel_heads.1} parent=47 // pred_check
          %p383 = pneg %p179
        $region74: #{generator_with_parallel_heads.1} parent=47 // pred_check_branch
          %385 = sbr.rel (%p383) target = $region76
        $region75: #{generator_with_parallel_heads.1} parent=47 // pred_region
          %386 = dma.done [#allocation12], 16
        $region76: #{generator_with_parallel_heads.1} parent=47 // pred_fallthru
          _
        %s387 = sand.u32 %s40, 1
        %s388 = scalar_lea.sflag [#allocation3], %s387
        %s389 = sand.u32 %s40, 1
        %s390 = smul.addr %s389, 32
        %s391 = scalar_lea.vmem [#allocation2], %s390
        %p392 = pneg %p53
        %p393 = pneg %p50
        %p394 = pneg %p74
        %p395 = pneg %p71
        %p396 = pneg %p95
        %p397 = pneg %p92
        %p398 = pneg %p116
        %p399 = pneg %p113
        %p400 = pneg %p137
        %p401 = pneg %p134
        %p402 = pneg %p158
        %p403 = pneg %p155
        %p404 = pneg %p179
        %p405 = pneg %p176
        %p406 = pneg %p205
        %p407 = pneg %p202
        %s408 = sand.u32 %s192, 1
        %s409 = scalar_lea.sflag [#allocation4], %s408
        %s410 = sand.u32 %s192, 1
        %s411 = smul.addr %s410, 32
        %s412 = scalar_lea.vmem [#allocation14], %s411
        %p413 = pneg %p231
        %p414 = pneg %p228
        %s415 = sand.u32 %s218, 1
        %s416 = scalar_lea.sflag [#allocation16], %s415
        %s417 = sand.u32 %s218, 1
        %s418 = smul.addr %s417, 32
        %s419 = scalar_lea.vmem [#allocation15], %s418
        %s420 = smul.u32 4, %s32
        %s421 = ssub.s32 6, %s420
        %p422 = scmp.lt.s32.totalorder %s421, 4
        %s423 = scalar_select %p422, %s421, 4
        %s424 = smul.u32 128, %s423
        %s425 = smul.u32 4, %s32
        %s426 = ssub.s32 6, %s425
        %p427 = scmp.lt.s32.totalorder %s426, 4
        %s428 = scalar_select %p427, %s426, 4
        %s429 = smul.u32 128, %s428
        %s430 = smul.u32 4, %s32
        %s431 = ssub.s32 6, %s430
        %p432 = scmp.lt.s32.totalorder %s431, 4
        %s433 = scalar_select %p432, %s431, 4
        %s434 = smul.u32 128, %s433
        %v436 = vld [vmem:[%s358] sm:$0xff]
        %v437 = vld [vmem:[%s358 + $0x8] sm:$0xff]
        %v438 = vld [vmem:[%s358 + $0x10] sm:$0xff]
        %v439 = vld [vmem:[%s358 + $0x18] sm:$0xff]
        %v440 = vpack.c.bf16 %v437, %v436
        %v441 = vpack.c.bf16 %v439, %v438
        %v442 = vld [vmem:[#allocation5] sm:$0xff]
        %v443 = vld [vmem:[#allocation5 + $0x8] sm:$0xf]
        %v444 = vld [vmem:[#allocation5 + $0xc] sm:$0xff]
        %v445 = vld [vmem:[#allocation5 + $0x14] sm:$0xf]
        %v446 = vld [vmem:[#allocation5 + $0x18] sm:$0xff]
        %v447 = vld [vmem:[#allocation5 + $0x20] sm:$0xf]
        %v448 = vld [vmem:[#allocation5 + $0x24] sm:$0xff]
        %v449 = vld [vmem:[#allocation5 + $0x2c] sm:$0xf]
        %v450 = vld [vmem:[#allocation5 + $0x30] sm:$0xff]
        %v451 = vld [vmem:[#allocation5 + $0x38] sm:$0xf]
        %v452 = vld [vmem:[#allocation5 + $0x3c] sm:$0xff]
        %v453 = vld [vmem:[#allocation5 + $0x44] sm:$0xf]
        %v454 = vld [vmem:[#allocation5 + $0x48] sm:$0xff]
        %v455 = vld [vmem:[#allocation5 + $0x50] sm:$0xf]
        %v456 = vld [vmem:[#allocation5 + $0x54] sm:$0xff]
        %v457 = vld [vmem:[#allocation5 + $0x5c] sm:$0xf]
        %v458 = vld [vmem:[#allocation7] sm:$0x7]
        %v460 = vlaneseq
        %v461 = vshrl.u32 %v460, 7
        %v462 = vsub.s32 0, %v461
        %v463 = vrot.slane %v458, %v462
        %v464 = vlaneseq
        %v465 = vshrl.u32 %v464, 7
        %v466 = vsub.s32 1, %v465
        %v467 = vrot.slane %v458, %v466
        %v468 = vlaneseq
        %v469 = vshrl.u32 %v468, 7
        %v470 = vsub.s32 2, %v469
        %v471 = vrot.slane %v458, %v470
        %v491 = vunpack.c.l.b16 %v442
        %v492 = vunpack.c.h.b16 %v442
        %v493 = vunpack.c.l.b16 %v443
        %v494 = vunpack.c.l.b16 %v444
        %v495 = vunpack.c.h.b16 %v444
        %v496 = vunpack.c.l.b16 %v445
        %v497 = vunpack.c.l.b16 %v446
        %v498 = vunpack.c.h.b16 %v446
        %v499 = vunpack.c.l.b16 %v447
        %v500 = vunpack.c.l.b16 %v448
        %v501 = vunpack.c.h.b16 %v448
        %v502 = vunpack.c.l.b16 %v449
        %v503 = vunpack.c.l.b16 %v450
        %v504 = vunpack.c.h.b16 %v450
        %v505 = vunpack.c.l.b16 %v451
        %v506 = vunpack.c.l.b16 %v452
        %v507 = vunpack.c.h.b16 %v452
        %v508 = vunpack.c.l.b16 %v453
        %v509 = vunpack.c.l.b16 %v454
        %v510 = vunpack.c.h.b16 %v454
        %v511 = vunpack.c.l.b16 %v455
        %v512 = vunpack.c.l.b16 %v456
        %v513 = vunpack.c.h.b16 %v456
        %v514 = vunpack.c.l.b16 %v457
        %v515 = vpack.c.b16 %v494, %v491
        %v516 = vpack.c.b16 %v495, %v492
        %v517 = vpack.c.b16 %v496, %v493
        %v518 = vpack.c.b16 %v500, %v497
        %v519 = vpack.c.b16 %v501, %v498
        %v520 = vpack.c.b16 %v502, %v499
        %v521 = vpack.c.b16 %v506, %v503
        %v522 = vpack.c.b16 %v507, %v504
        %v523 = vpack.c.b16 %v508, %v505
        %v524 = vpack.c.b16 %v512, %v509
        %v525 = vpack.c.b16 %v513, %v510
        %v526 = vpack.c.b16 %v514, %v511
        %vm539 = vcmask 523264
        %v541 = vsel %vm539, %v440, 0
        %v544 = vsel %vm539, %v441, 0
        %546 = vmatprep.subr.bf16.mxu0 %v516
        %547 = vmatpush1.bf16.msra.mxu0 %v515
        %548 = vmatprep.subr.bf16.mxu0 %v519
        %549 = vmatpush1.bf16.msra.mxu0 %v518
        %550 = vmatprep.subr.bf16.mxu0 %v522
        %551 = vmatpush1.bf16.msra.mxu0 %v521
        %552 = vmatprep.subr.bf16.mxu0 %v525
        %553 = vmatpush1.bf16.msra.mxu0 %v524
        %554 = vmatprep.subr.bf16.mxu0 0
        %555 = vmatpush1.bf16.msra.mxu0 0
        %556 = vmatprep.subr.bf16.mxu0 0
        %557 = vmatpush1.bf16.msra.mxu0 0
        %558 = vmatprep.subr.bf16.mxu0 0
        %559 = vmatpush1.bf16.msra.mxu0 0
        %560 = vmatprep.subr.bf16.mxu0 0
        %561 = vmatpush1.bf16.msra.mxu0 0
        %562 = vmatprep.subr.bf16.mxu0 0
        %563 = vmatpush1.bf16.msra.mxu0 0
        %564 = vmatprep.subr.bf16.mxu0 0
        %565 = vmatpush1.bf16.msra.mxu0 0
        %566 = vmatprep.subr.bf16.mxu0 0
        %567 = vmatpush1.bf16.msra.mxu0 0
        %568 = vmatprep.subr.bf16.mxu0 0
        %569 = vmatpush1.bf16.msra.mxu0 0
        %570 = vmatprep.subr.bf16.mxu0 0
        %571 = vmatpush1.bf16.msra.mxu0 0
        %572 = vmatprep.subr.bf16.mxu0 0
        %573 = vmatpush1.bf16.msra.mxu0 0
        %574 = vmatprep.subr.bf16.mxu0 0
        %575 = vmatpush1.bf16.msra.mxu0 0
        %576 = vmatprep.subr.bf16.mxu0 0
        %577 = vmatpush1.bf16.msra.mxu0 0
        %578 = vmatprep.mubr.bf16.mxu0 0
        %579 = vmatmul.mubr.bf16.gmra.mrb[0].mxu0 %v541
        %v580 = vpop.f32.mrb[0].mxu0
        %v581 = vadd.f32 %v463, %v580
        %v582 = vpop.f32.mrb[0].mxu0
        %v583 = vadd.f32 %v467, %v582
        %v584 = vpop.f32.mrb[0].mxu0
        %v585 = vadd.f32 %v463, %v584
        %v586 = vpop.f32.mrb[0].mxu0
        %v587 = vadd.f32 %v467, %v586
        %588 = vmatprep.mubr.bf16.mxu0 0
        %589 = vmatmul.mubr.bf16.gmra.mrb[0].mxu0 %v544
        %v590 = vpop.f32.mrb[0].mxu0
        %v591 = vadd.f32 %v463, %v590
        %v592 = vpop.f32.mrb[0].mxu0
        %v593 = vadd.f32 %v467, %v592
        %v594 = vpop.f32.mrb[0].mxu0
        %v595 = vadd.f32 %v463, %v594
        %v596 = vpop.f32.mrb[0].mxu0
        %v597 = vadd.f32 %v467, %v596
        %598 = vdwg.mxu0
        %599 = vmatprep.subr.bf16.mxu0 0
        %600 = vmatpush1.bf16.msra.mxu0 %v517
        %601 = vmatprep.subr.bf16.mxu0 0
        %602 = vmatpush1.bf16.msra.mxu0 %v520
        %603 = vmatprep.subr.bf16.mxu0 0
        %604 = vmatpush1.bf16.msra.mxu0 %v523
        %605 = vmatprep.subr.bf16.mxu0 0
        %606 = vmatpush1.bf16.msra.mxu0 %v526
        %607 = vmatprep.subr.bf16.mxu0 0
        %608 = vmatpush1.bf16.msra.mxu0 0
        %609 = vmatprep.subr.bf16.mxu0 0
        %610 = vmatpush1.bf16.msra.mxu0 0
        %611 = vmatprep.subr.bf16.mxu0 0
        %612 = vmatpush1.bf16.msra.mxu0 0
        %613 = vmatprep.subr.bf16.mxu0 0
        %614 = vmatpush1.bf16.msra.mxu0 0
        %615 = vmatprep.subr.bf16.mxu0 0
        %616 = vmatpush1.bf16.msra.mxu0 0
        %617 = vmatprep.subr.bf16.mxu0 0
        %618 = vmatpush1.bf16.msra.mxu0 0
        %619 = vmatprep.subr.bf16.mxu0 0
        %620 = vmatpush1.bf16.msra.mxu0 0
        %621 = vmatprep.subr.bf16.mxu0 0
        %622 = vmatpush1.bf16.msra.mxu0 0
        %623 = vmatprep.subr.bf16.mxu0 0
        %624 = vmatpush1.bf16.msra.mxu0 0
        %625 = vmatprep.subr.bf16.mxu0 0
        %626 = vmatpush1.bf16.msra.mxu0 0
        %627 = vmatprep.subr.bf16.mxu0 0
        %628 = vmatpush1.bf16.msra.mxu0 0
        %629 = vmatprep.subr.bf16.mxu0 0
        %630 = vmatpush1.bf16.msra.mxu0 0
        %631 = vmatprep.mubr.bf16.mxu0 0
        %632 = vmatmul.mubr.bf16.gmra.mrb[0].mxu0 %v541
        %v633 = vpop.f32.mrb[0].mxu0
        %v634 = vadd.f32 %v471, %v633
        %v635 = vpop.f32.mrb[0].mxu0
        %v636 = vpop.f32.mrb[0].mxu0
        %v637 = vadd.f32 %v471, %v636
        %v638 = vpop.f32.mrb[0].mxu0
        %639 = vmatprep.mubr.bf16.mxu0 0
        %640 = vmatmul.mubr.bf16.gmra.mrb[0].mxu0 %v544
        %v641 = vpop.f32.mrb[0].mxu0
        %v642 = vadd.f32 %v471, %v641
        %v643 = vpop.f32.mrb[0].mxu0
        %v644 = vpop.f32.mrb[0].mxu0
        %v645 = vadd.f32 %v471, %v644
        %v646 = vpop.f32.mrb[0].mxu0
        %647 = vdwg.mxu0
        %v648 = vld [vmem:[#allocation8] sm:$0xf]
        %v649 = vadd.f32 %v581, %v583
        %650 = vadd.xlane.f32.xlu0 %v649
        %v651 = vpop.xlane.xlu0 %650
        %v652 = vadd.f32 %v585, %v587
        %653 = vadd.xlane.f32.xlu0 %v652
        %v654 = vpop.xlane.xlu0 %653
        %v655 = vadd.f32 %v591, %v593
        %656 = vadd.xlane.f32.xlu0 %v655
        %v657 = vpop.xlane.xlu0 %656
        %v658 = vadd.f32 %v595, %v597
        %659 = vadd.xlane.f32.xlu0 %v658
        %v660 = vpop.xlane.xlu0 %659
        %v661 = vrcp.pop 256.0
        %v662 = vmul.f32 %v651, %v661
        %v663 = vmul.f32 %v654, %v661
        %v664 = vmul.f32 %v657, %v661
        %v665 = vmul.f32 %v660, %v661
        %v666 = vsub.f32 %v581, %v662
        %v667 = vsub.f32 %v583, %v662
        %v668 = vsub.f32 %v585, %v663
        %v669 = vsub.f32 %v587, %v663
        %v670 = vsub.f32 %v591, %v664
        %v671 = vsub.f32 %v593, %v664
        %v672 = vsub.f32 %v595, %v665
        %v673 = vsub.f32 %v597, %v665
        %v674 = vmul.f32 %v666, %v666
        %v675 = vmul.f32 %v667, %v667
        %v676 = vmul.f32 %v668, %v668
        %v677 = vmul.f32 %v669, %v669
        %v678 = vmul.f32 %v670, %v670
        %v679 = vmul.f32 %v671, %v671
        %v680 = vmul.f32 %v672, %v672
        %v681 = vmul.f32 %v673, %v673
        %v682 = vadd.f32 %v674, %v675
        %683 = vadd.xlane.f32.xlu0 %v682
        %v684 = vpop.xlane.xlu0 %683
        %v685 = vadd.f32 %v676, %v677
        %686 = vadd.xlane.f32.xlu0 %v685
        %v687 = vpop.xlane.xlu0 %686
        %v688 = vadd.f32 %v678, %v679
        %689 = vadd.xlane.f32.xlu0 %v688
        %v690 = vpop.xlane.xlu0 %689
        %v691 = vadd.f32 %v680, %v681
        %692 = vadd.xlane.f32.xlu0 %v691
        %v693 = vpop.xlane.xlu0 %692
        %v694 = vmul.f32 %v684, %v661
        %v695 = vmul.f32 %v687, %v661
        %v696 = vmul.f32 %v690, %v661
        %v697 = vmul.f32 %v693, %v661
        %v698 = vadd.f32 %v694, 1e-05
        %v699 = vadd.f32 %v695, 1e-05
        %v700 = vadd.f32 %v696, 1e-05
        %v701 = vadd.f32 %v697, 1e-05
        %v702 = vrsqrt.pop %v698
        %v703 = vrsqrt.pop %v699
        %v704 = vrsqrt.pop %v700
        %v705 = vrsqrt.pop %v701
        %v706 = vmul.f32 %v666, %v702
        %v707 = vmul.f32 %v667, %v702
        %v708 = vmul.f32 %v668, %v703
        %v709 = vmul.f32 %v669, %v703
        %v710 = vmul.f32 %v670, %v704
        %v711 = vmul.f32 %v671, %v704
        %v712 = vmul.f32 %v672, %v705
        %v713 = vmul.f32 %v673, %v705
        %v715 = vlaneseq
        %v716 = vshrl.u32 %v715, 7
        %v717 = vsub.s32 0, %v716
        %v718 = vrot.slane %v648, %v717
        %v719 = vlaneseq
        %v720 = vshrl.u32 %v719, 7
        %v721 = vsub.s32 2, %v720
        %v722 = vrot.slane %v648, %v721
        %v725 = vlaneseq
        %v726 = vshrl.u32 %v725, 7
        %v727 = vsub.s32 0, %v726
        %v728 = vrot.slane %v718, %v727
        %v729 = vlaneseq
        %v730 = vshrl.u32 %v729, 7
        %v731 = vsub.s32 0, %v730
        %v732 = vrot.slane %v722, %v731
        %v733 = vmul.f32 %v706, %v728
        %v734 = vmul.f32 %v707, %v732
        %v735 = vmul.f32 %v708, %v728
        %v736 = vmul.f32 %v709, %v732
        %v737 = vmul.f32 %v710, %v728
        %v738 = vmul.f32 %v711, %v732
        %v739 = vmul.f32 %v712, %v728
        %v740 = vmul.f32 %v713, %v732
        %v741 = vlaneseq
        %v742 = vshrl.u32 %v741, 7
        %v743 = vsub.s32 1, %v742
        %v744 = vrot.slane %v648, %v743
        %v745 = vlaneseq
        %v746 = vshrl.u32 %v745, 7
        %v747 = vsub.s32 3, %v746
        %v748 = vrot.slane %v648, %v747
        %v751 = vlaneseq
        %v752 = vshrl.u32 %v751, 7
        %v753 = vsub.s32 1, %v752
        %v754 = vrot.slane %v744, %v753
        %v755 = vlaneseq
        %v756 = vshrl.u32 %v755, 7
        %v757 = vsub.s32 1, %v756
        %v758 = vrot.slane %v748, %v757
        %v759 = vadd.f32 %v733, %v754
        %v760 = vadd.f32 %v734, %v758
        %v761 = vadd.f32 %v735, %v754
        %v762 = vadd.f32 %v736, %v758
        %v763 = vadd.f32 %v737, %v754
        %v764 = vadd.f32 %v738, %v758
        %v765 = vadd.f32 %v739, %v754
        %v766 = vadd.f32 %v740, %v758
        %v767 = vmax.f32 %v759, 0.0
        %v768 = vmax.f32 %v760, 0.0
        %v769 = vmax.f32 %v761, 0.0
        %v770 = vmax.f32 %v762, 0.0
        %v771 = vmax.f32 %v763, 0.0
        %v772 = vmax.f32 %v764, 0.0
        %v773 = vmax.f32 %v765, 0.0
        %v774 = vmax.f32 %v766, 0.0
        %v775 = vpack.c.bf16 %v769, %v767
        %v776 = vpack.c.bf16 %v770, %v768
        %v777 = vpack.c.bf16 %v773, %v771
        %v778 = vpack.c.bf16 %v774, %v772
        %v779 = vld [vmem:[#allocation10] sm:$0xf]
        %v780 = vld [vmem:[#allocation10 + $0x4] sm:$0xf]
        %v781 = vld [vmem:[#allocation10 + $0x8] sm:$0xf]
        %v782 = vld [vmem:[#allocation10 + $0xc] sm:$0xf]
        %v783 = vld [vmem:[#allocation10 + $0x10] sm:$0xf]
        %v784 = vld [vmem:[#allocation10 + $0x14] sm:$0xf]
        %v785 = vld [vmem:[#allocation10 + $0x18] sm:$0xf]
        %v786 = vld [vmem:[#allocation10 + $0x1c] sm:$0xf]
        %v787 = vld [vmem:[#allocation10 + $0x20] sm:$0xf]
        %v788 = vld [vmem:[#allocation10 + $0x24] sm:$0xf]
        %v789 = vld [vmem:[#allocation10 + $0x28] sm:$0xf]
        %v790 = vld [vmem:[#allocation10 + $0x2c] sm:$0xf]
        %v791 = vld [vmem:[#allocation10 + $0x30] sm:$0xf]
        %v792 = vld [vmem:[#allocation10 + $0x34] sm:$0xf]
        %v793 = vld [vmem:[#allocation10 + $0x38] sm:$0xf]
        %v794 = vld [vmem:[#allocation10 + $0x3c] sm:$0xf]
        %v795 = vld [vmem:[#allocation10 + $0x40] sm:$0xf]
        %v796 = vld [vmem:[#allocation10 + $0x44] sm:$0xf]
        %v797 = vld [vmem:[#allocation10 + $0x48] sm:$0xf]
        %v798 = vld [vmem:[#allocation10 + $0x4c] sm:$0xf]
        %v799 = vld [vmem:[#allocation10 + $0x50] sm:$0xf]
        %v800 = vld [vmem:[#allocation10 + $0x54] sm:$0xf]
        %v801 = vld [vmem:[#allocation10 + $0x58] sm:$0xf]
        %v802 = vld [vmem:[#allocation10 + $0x5c] sm:$0xf]
        %v803 = vld [vmem:[#allocation10 + $0x60] sm:$0xf]
        %v804 = vld [vmem:[#allocation10 + $0x64] sm:$0xf]
        %v805 = vld [vmem:[#allocation10 + $0x68] sm:$0xf]
        %v806 = vld [vmem:[#allocation10 + $0x6c] sm:$0xf]
        %v807 = vld [vmem:[#allocation10 + $0x70] sm:$0xf]
        %v808 = vld [vmem:[#allocation10 + $0x74] sm:$0xf]
        %v809 = vld [vmem:[#allocation10 + $0x78] sm:$0xf]
        %v810 = vld [vmem:[#allocation10 + $0x7c] sm:$0xf]
        %v811 = vld [vmem:[#allocation11] sm:$0x1]
        %v813 = vlaneseq
        %v814 = vshrl.u32 %v813, 7
        %v815 = vsub.s32 0, %v814
        %v816 = vrot.slane %v811, %v815
        %v850 = vunpack.c.l.b16 %v779
        %v851 = vunpack.c.l.b16 %v780
        %v852 = vunpack.c.l.b16 %v781
        %v853 = vunpack.c.l.b16 %v782
        %v854 = vunpack.c.l.b16 %v783
        %v855 = vunpack.c.l.b16 %v784
        %v856 = vunpack.c.l.b16 %v785
        %v857 = vunpack.c.l.b16 %v786
        %v858 = vunpack.c.l.b16 %v787
        %v859 = vunpack.c.l.b16 %v788
        %v860 = vunpack.c.l.b16 %v789
        %v861 = vunpack.c.l.b16 %v790
        %v862 = vunpack.c.l.b16 %v791
        %v863 = vunpack.c.l.b16 %v792
        %v864 = vunpack.c.l.b16 %v793
        %v865 = vunpack.c.l.b16 %v794
        %v866 = vunpack.c.l.b16 %v795
        %v867 = vunpack.c.l.b16 %v796
        %v868 = vunpack.c.l.b16 %v797
        %v869 = vunpack.c.l.b16 %v798
        %v870 = vunpack.c.l.b16 %v799
        %v871 = vunpack.c.l.b16 %v800
        %v872 = vunpack.c.l.b16 %v801
        %v873 = vunpack.c.l.b16 %v802
        %v874 = vunpack.c.l.b16 %v803
        %v875 = vunpack.c.l.b16 %v804
        %v876 = vunpack.c.l.b16 %v805
        %v877 = vunpack.c.l.b16 %v806
        %v878 = vunpack.c.l.b16 %v807
        %v879 = vunpack.c.l.b16 %v808
        %v880 = vunpack.c.l.b16 %v809
        %v881 = vunpack.c.l.b16 %v810
        %v882 = vpack.c.b16 %v851, %v850
        %v883 = vpack.c.b16 %v853, %v852
        %v884 = vpack.c.b16 %v855, %v854
        %v885 = vpack.c.b16 %v857, %v856
        %v886 = vpack.c.b16 %v859, %v858
        %v887 = vpack.c.b16 %v861, %v860
        %v888 = vpack.c.b16 %v863, %v862
        %v889 = vpack.c.b16 %v865, %v864
        %v890 = vpack.c.b16 %v867, %v866
        %v891 = vpack.c.b16 %v869, %v868
        %v892 = vpack.c.b16 %v871, %v870
        %v893 = vpack.c.b16 %v873, %v872
        %v894 = vpack.c.b16 %v875, %v874
        %v895 = vpack.c.b16 %v877, %v876
        %v896 = vpack.c.b16 %v879, %v878
        %v897 = vpack.c.b16 %v881, %v880
        %914 = vmatprep.subr.bf16.mxu0 0
        %915 = vmatpush1.bf16.msra.mxu0 %v882
        %916 = vmatprep.subr.bf16.mxu0 0
        %917 = vmatpush1.bf16.msra.mxu0 %v883
        %918 = vmatprep.subr.bf16.mxu0 0
        %919 = vmatpush1.bf16.msra.mxu0 %v884
        %920 = vmatprep.subr.bf16.mxu0 0
        %921 = vmatpush1.bf16.msra.mxu0 %v885
        %922 = vmatprep.subr.bf16.mxu0 0
        %923 = vmatpush1.bf16.msra.mxu0 %v886
        %924 = vmatprep.subr.bf16.mxu0 0
        %925 = vmatpush1.bf16.msra.mxu0 %v887
        %926 = vmatprep.subr.bf16.mxu0 0
        %927 = vmatpush1.bf16.msra.mxu0 %v888
        %928 = vmatprep.subr.bf16.mxu0 0
        %929 = vmatpush1.bf16.msra.mxu0 %v889
        %930 = vmatprep.subr.bf16.mxu0 0
        %931 = vmatpush1.bf16.msra.mxu0 %v890
        %932 = vmatprep.subr.bf16.mxu0 0
        %933 = vmatpush1.bf16.msra.mxu0 %v891
        %934 = vmatprep.subr.bf16.mxu0 0
        %935 = vmatpush1.bf16.msra.mxu0 %v892
        %936 = vmatprep.subr.bf16.mxu0 0
        %937 = vmatpush1.bf16.msra.mxu0 %v893
        %938 = vmatprep.subr.bf16.mxu0 0
        %939 = vmatpush1.bf16.msra.mxu0 %v894
        %940 = vmatprep.subr.bf16.mxu0 0
        %941 = vmatpush1.bf16.msra.mxu0 %v895
        %942 = vmatprep.subr.bf16.mxu0 0
        %943 = vmatpush1.bf16.msra.mxu0 %v896
        %944 = vmatprep.subr.bf16.mxu0 0
        %945 = vmatpush1.bf16.msra.mxu0 %v897
        %946 = vmatprep.mubr.bf16.mxu0 %v776
        %947 = vmatmul.mubr.bf16.gmra.mrb[0].mxu0 %v775
        %v948 = vpop.f32.mrb[0].mxu0
        %v949 = vadd.f32 %v816, %v948
        %v950 = vpop.f32.mrb[0].mxu0
        %v951 = vpop.f32.mrb[0].mxu0
        %v952 = vadd.f32 %v816, %v951
        %v953 = vpop.f32.mrb[0].mxu0
        %954 = vmatprep.mubr.bf16.mxu0 %v778
        %955 = vmatmul.mubr.bf16.gmra.mrb[0].mxu0 %v777
        %v956 = vpop.f32.mrb[0].mxu0
        %v957 = vadd.f32 %v816, %v956
        %v958 = vpop.f32.mrb[0].mxu0
        %v959 = vpop.f32.mrb[0].mxu0
        %v960 = vadd.f32 %v816, %v959
        %v961 = vpop.f32.mrb[0].mxu0
        %962 = vdwg.mxu0
        %vm963 = vcmask 97280
        %964 = vst.msk [vmem:[%s412] sm:$0xff] %vm963, %v949
        %965 = vst.msk [vmem:[%s412 + $0x8] sm:$0xff] %vm963, %v952
        %966 = vst.msk [vmem:[%s412 + $0x10] sm:$0xff] %vm963, %v957
        %967 = vst.msk [vmem:[%s412 + $0x18] sm:$0xff] %vm963, %v960
        %v968 = vmax.f32 %v634, 0.0
        %v969 = vmax.f32 %v637, 0.0
        %v970 = vmax.f32 %v642, 0.0
        %v971 = vmax.f32 %v645, 0.0
        %v972 = vld [vmem:[#allocation13] sm:$0x1]
        %v974 = vlaneseq
        %v975 = vshrl.u32 %v974, 7
        %v976 = vsub.s32 0, %v975
        %v977 = vrot.slane %v972, %v976
        %v979 = vmul.f32 %v968, %v977
        %v980 = vmul.f32 %v969, %v977
        %v981 = vmul.f32 %v970, %v977
        %v982 = vmul.f32 %v971, %v977
        %983 = vadd.xlane.f32.xlu0 %v979
        %v984 = vpop.xlane.xlu0 %983
        %985 = vadd.xlane.f32.xlu0 %v980
        %v986 = vpop.xlane.xlu0 %985
        %987 = vadd.xlane.f32.xlu0 %v981
        %v988 = vpop.xlane.xlu0 %987
        %989 = vadd.xlane.f32.xlu0 %v982
        %v990 = vpop.xlane.xlu0 %989
        %vm991 = vcmask 7168
        %992 = vst.msk [vmem:[%s419] sm:$0xff] %vm991, %v984
        %993 = vst.msk [vmem:[%s419 + $0x8] sm:$0xff] %vm991, %v986
        %994 = vst.msk [vmem:[%s419 + $0x10] sm:$0xff] %vm991, %v988
        %995 = vst.msk [vmem:[%s419 + $0x18] sm:$0xff] %vm991, %v990
        %s996 = sand.u32 %s192, 1
        %s997 = scalar_lea.sflag [#allocation4], %s996
        %s998 = sand.u32 %s192, 1
        %s999 = smul.addr %s998, 32
        %s1000 = scalar_lea.vmem [#allocation14], %s999
        %s1001 = sand.u32 %s218, 1
        %s1002 = scalar_lea.sflag [#allocation16], %s1001
        %s1003 = sand.u32 %s218, 1
        %s1004 = smul.addr %s1003, 32
        %s1005 = scalar_lea.vmem [#allocation15], %s1004
        // Predicated region
        $region77: #{generator_with_parallel_heads.1} parent=47 // pred_check
          %p1006 = pneg %p202
        $region78: #{generator_with_parallel_heads.1} parent=47 // pred_check_branch
          %1008 = sbr.rel (%p1006) target = $region80
        $region79: #{generator_with_parallel_heads.1} parent=47 // pred_region
          %s1009 = smul.u32 4, %s32
          %s1010 = ssub.s32 6, %s1009
          %p1011 = scmp.lt.s32.totalorder %s1010, 4
          %s1012 = scalar_select %p1011, %s1010, 4
          %s1013 = smul.u32 128, %s1012
          %s1015 = ssub.s32 512, %s1013
          %1016 = vsyncadd %s997, %s1015
          %p1017 = scmp.ne.s32.totalorder 0, %s1013
          %s1018 = smul.addr %s1009, 128
          %s1019 = scalar_lea.hbm %s7, %s1018
          %s1020 = smul.u32 8, %s1012
          %s1021 = sshll.u32 %s1000, 4
          %s1022 = int_to_ptr.vmem [resolvable:$true] %s1021
          %s1023 = sshll.u32 %s1020, 4
          %1027 = dma.vmem_to_hbm [thread:$0]  (%p1017), %s1022, %s1023, %s1019, %s997, 128, 128, 8
        $region80: #{generator_with_parallel_heads.1} parent=47 // pred_fallthru
          _
        // Predicated region
        $region81: #{generator_with_parallel_heads.1} parent=47 // pred_check
          %p1028 = pneg %p228
        $region82: #{generator_with_parallel_heads.1} parent=47 // pred_check_branch
          %1030 = sbr.rel (%p1028) target = $region84
        $region83: #{generator_with_parallel_heads.1} parent=47 // pred_region
          %s1031 = smul.u32 4, %s32
          %s1032 = ssub.s32 6, %s1031
          %p1033 = scmp.lt.s32.totalorder %s1032, 4
          %s1034 = scalar_select %p1033, %s1032, 4
          %s1035 = smul.u32 128, %s1034
          %s1037 = ssub.s32 512, %s1035
          %1038 = vsyncadd %s1002, %s1037
          %p1039 = scmp.ne.s32.totalorder 0, %s1035
          %s1040 = smul.addr %s1031, 128
          %s1041 = scalar_lea.hbm %s8, %s1040
          %s1042 = smul.u32 8, %s1034
          %s1043 = sshll.u32 %s1005, 4
          %s1044 = int_to_ptr.vmem [resolvable:$true] %s1043
          %s1045 = sshll.u32 %s1042, 4
          %1049 = dma.vmem_to_hbm [thread:$0]  (%p1039), %s1044, %s1045, %s1041, %s1002, 128, 128, 8
        $region84: #{generator_with_parallel_heads.1} parent=47 // pred_fallthru
          _
      $region48: #{generator_with_parallel_heads.1} parent=5 // pred_fallthru
        _
      %p1050 = scmp.le.s32.totalorder 2, %s27
      // Predicated region
      $region85: #{generator_with_parallel_heads.1} parent=5 // pred_check
        %p1051 = pneg %p1050
      $region86: #{generator_with_parallel_heads.1} parent=5 // pred_check_branch
        %1053 = sbr.rel (%p1051) target = $region88
      $region87: #{generator_with_parallel_heads.1} parent=5 // pred_region
        %s1054 = ssub.s32 %s27, 2
        // Predicated region
        $region89: #{generator_with_parallel_heads.1} parent=87 // pred_check
          %p1055 = pneg %p208
        $region90: #{generator_with_parallel_heads.1} parent=87 // pred_check_branch
          %1057 = sbr.rel (%p1055) target = $region92
        $region91: #{generator_with_parallel_heads.1} parent=87 // pred_region
          %s1058 = sand.u32 %s193, 1
          %s1059 = scalar_lea.sflag [#allocation4], %s1058
          %s1060 = sand.u32 %s193, 1
          %s1061 = smul.addr %s1060, 32
          %s1062 = scalar_lea.vmem [#allocation14], %s1061
          %1063 = dma.done %s1059, 512
        $region92: #{generator_with_parallel_heads.1} parent=87 // pred_fallthru
          _
        // Predicated region
        $region93: #{generator_with_parallel_heads.1} parent=87 // pred_check
          %p1064 = pneg %p234
        $region94: #{generator_with_parallel_heads.1} parent=87 // pred_check_branch
          %1066 = sbr.rel (%p1064) target = $region96
        $region95: #{generator_with_parallel_heads.1} parent=87 // pred_region
          %s1067 = sand.u32 %s219, 1
          %s1068 = scalar_lea.sflag [#allocation16], %s1067
          %s1069 = sand.u32 %s219, 1
          %s1070 = smul.addr %s1069, 32
          %s1071 = scalar_lea.vmem [#allocation15], %s1070
          %1072 = dma.done %s1068, 512
        $region96: #{generator_with_parallel_heads.1} parent=87 // pred_fallthru
          _
      $region88: #{generator_with_parallel_heads.1} parent=5 // pred_fallthru
        _
    $region6: #{generator_with_parallel_heads.1} parent=1 // loop_footer
      %s31 = sadd.s32 1, %s27
    $region7: #{generator_with_parallel_heads.1} parent=1 // loop_footer_branch
      %26 = sbr.rel target = $region3
    $region8: #{generator_with_parallel_heads.1} parent=1 // loop_exit
      _
    %1073 = vsyncpa [#allocation3], 1
    %s1074 = scalar_lea.sflag [#allocation3], 1
    %1075 = vsyncpa %s1074, 1
    %1076 = vsyncpa [#allocation6], 1
    %1077 = vsyncpa [#allocation9], 1
    %1078 = vsyncpa [#allocation12], 1
    %1079 = vsyncpa [#allocation4], 1
    %s1080 = scalar_lea.sflag [#allocation4], 1
    %1081 = vsyncpa %s1080, 1
    %1082 = vsyncpa [#allocation16], 1
    %s1083 = scalar_lea.sflag [#allocation16], 1
    %1084 = vsyncpa %s1083, 1

</llo_original>
